<compile_context>
chip_gen: v7x
topology: tpu7x:2x2x1
jax: 0.10.0
libtpu: 0.0.40
codegen_flags: <defaults>
</compile_context>

<pallas_src>
import math

import jax
import jax.numpy as jnp
from jax.experimental import pallas as pl
from jax.experimental.pallas import tpu as pltpu

# Positions in the flattened 5x5 buffer receiving +w and -w (same as PyTorch).
_POS_IDX = (0, 2, 4, 10, 14, 20, 22, 24)
_NEG_IDX = (6, 7, 8, 11, 13, 16, 17, 18)
_PAIRS = tuple(zip(_POS_IDX, _NEG_IDX))   # pair j carries 3x3 flat element j+1

_LANE = 128


def _round_up(x, m):
    return ((x + m - 1) // m) * m


def _build_buffer(weight3x3):
    """Expand (O, I, 3, 3) into the (O, I, 5, 5) RD buffer (reference only)."""
    O, I, _, _ = weight3x3.shape
    wf = weight3x3.reshape(O, I, 9)[:, :, 1:]
    buf = jnp.zeros((O, I, 25), weight3x3.dtype)
    buf = buf.at[:, :, list(_POS_IDX)].set(wf)
    buf = buf.at[:, :, list(_NEG_IDX)].set(-wf)
    return buf.reshape(O, I, 5, 5)


def _pack_weight(weight3x3, cout_pad, dtype):
    """(O, I, 3, 3) -> (8*I, cout_pad); row j*I + i holds weight[o, i, flat j+1]."""
    O, I, _, _ = weight3x3.shape
    wf = weight3x3.reshape(O, I, 9)[:, :, 1:]              # (O, I, 8) shared taps
    w = jnp.transpose(wf, (2, 1, 0)).reshape(8 * I, O)     # pair-major, cin-minor
    w = jnp.pad(w, ((0, 0), (0, cout_pad - O)))            # lane-pad Cout
    return w.astype(dtype)


def _make_kernel(TOH, OW, stride, dilation, cin, compute_dtype):
    M = TOH * OW
    h_span = (TOH - 1) * stride + 1
    w_span = (OW - 1) * stride + 1

    def kernel(xlo_ref, xh_ref, w_ref, o_ref):
        # xlo_ref: (1, TOH*stride,  Wp, Cin)  main row slab for this output tile
        # xh_ref : (1, 4*dilation, Wp, Cin)   halo rows just below the slab
        # w_ref  : (8*Cin, TCO)               packed pair weights (zero taps dropped)
        # o_ref  : (1, TOH*OW, TCO)           lane-dense output tile
        x = jnp.concatenate([xlo_ref[0], xh_ref[0]], axis=0)   # (B + 4d, Wp, Cin)

        diffs = []
        for p, q in _PAIRS:                                    # 8 static pairs
            ph, pw = (p // 5) * dilation, (p % 5) * dilation
            qh, qw = (q // 5) * dilation, (q % 5) * dilation
            if stride == 1:
                pos = x[ph:ph + TOH, pw:pw + OW, :]
                neg = x[qh:qh + TOH, qw:qw + OW, :]
            else:
                # TODO(synk): for stride=2, pre-split into stride phases in the
                # wrapper (space-to-batch) to avoid strided in-kernel slices.
                pos = x[ph:ph + h_span:stride, pw:pw + w_span:stride, :]
                neg = x[qh:qh + h_span:stride, qw:qw + w_span:stride, :]
            diffs.append(pos - neg)                            # VPU subtract

        patch = jnp.concatenate(diffs, axis=-1).reshape(M, 8 * cin)
        out = jnp.dot(patch.astype(compute_dtype), w_ref[...],
                      preferred_element_type=jnp.float32)      # single MXU call
        o_ref[0] = out.astype(o_ref.dtype)

    return kernel


def rdconv2d(x_nchw, weight3x3, stride=1, dilation=1, *,
             row_tile=None, use_bf16_matmul=False, interpret=False):
    """Forward pass of RDConv2d (groups=1, bias=False — the module defaults).

    x_nchw:    (N, Cin, H, W) float32
    weight3x3: (Cout, Cin, 3, 3) float32
    returns:   (N, Cout, OH, OW) float32
    """
    assert dilation in (1, 2)
    N, C, H, W = x_nchw.shape
    O, I, kh, kw = weight3x3.shape
    assert (kh, kw) == (3, 3) and I == C
    # TODO(synk): groups > 1 and bias are not implemented (module defaults are
    # groups=1, bias=False).

    pad = 2 * dilation
    halo = 4 * dilation                        # extra input rows below a row tile
    OH = (H + 2 * pad - 4 * dilation - 1) // stride + 1
    OW = (W + 2 * pad - 4 * dilation - 1) // stride + 1
    Wp = W + 2 * pad

    # ------------------------------ tiling --------------------------------
    if row_tile is None:
        row_tile = max(8, 256 // max(OW, 1))   # target M = TOH*OW >= ~256
    TOH = _round_up(max(int(row_tile), 1), 8)  # multiple of 8 (=> multiple of 4*d)
    n_rtiles = pl.cdiv(OH, TOH)
    OH_pad = n_rtiles * TOH
    B = TOH * stride                           # input rows consumed per row tile

    cout_pad = _round_up(O, _LANE)
    TCO = 256 if cout_pad % 256 == 0 else _LANE
    n_ctiles = cout_pad // TCO

    # ------------------------------ operands ------------------------------
    compute_dtype = jnp.bfloat16 if use_bf16_matmul else x_nchw.dtype
    w_packed = _pack_weight(weight3x3, cout_pad, compute_dtype)   # (8*C, cout_pad)

    x_nhwc = jnp.transpose(x_nchw, (0, 2, 3, 1))
    # Bottom-pad H so every row tile plus its halo block reads in-bounds.
    h_total = _round_up(n_rtiles * B + halo, B)
    bot = h_total - (H + pad)
    xp = jnp.pad(x_nhwc, ((0, 0), (pad, bot), (pad, pad), (0, 0)))
    # TODO(synk): the NCHW<->NHWC transposes + pad are still wrapper-side HBM
    # round trips; they could be folded in via allow_input_fusion / in-kernel
    # boundary masks.

    kernel = _make_kernel(TOH, OW, stride, dilation, C, compute_dtype)

    # Size the scoped VMEM limit from the chosen tiles (double-buffer headroom).
    blk_bytes = (4 * (2 * B * Wp * C + 2 * halo * Wp * C + 2 * TOH * OW * TCO)
                 + 2 * 8 * C * TCO * w_packed.dtype.itemsize)
    vmem_limit = int(min(max(6 * blk_bytes, 16 * 2**20), 44 * 2**20))

    out_flat = pl.pallas_call(
        kernel,
        out_shape=jax.ShapeDtypeStruct((N, OH_pad * OW, cout_pad), x_nchw.dtype),
        grid_spec=pltpu.PrefetchScalarGridSpec(
            num_scalar_prefetch=0,
            grid=(N, n_ctiles, n_rtiles),
            in_specs=[
                # main row slab for this output row tile (block units of B rows)
                pl.BlockSpec((1, B, Wp, C), lambda n, c, r: (n, r, 0, 0)),
                # halo rows just below the slab (block units of `halo` rows)
                pl.BlockSpec((1, halo, Wp, C),
                             lambda n, c, r: (n, (r + 1) * (B // halo), 0, 0)),
                # packed pair-weights, tiled over Cout (lane-dense, no zero taps)
                pl.BlockSpec((8 * C, TCO), lambda n, c, r: (0, c)),
            ],
            out_specs=pl.BlockSpec((1, TOH * OW, TCO), lambda n, c, r: (n, r, c)),
        ),
        compiler_params=pltpu.CompilerParams(
            dimension_semantics=("parallel", "parallel", "parallel"),
            vmem_limit_bytes=vmem_limit),
        interpret=interpret,
    )(xp, xp, w_packed)

    out = out_flat.reshape(N, OH_pad, OW, cout_pad)[:, :OH, :, :O]
    return jnp.transpose(out, (0, 3, 1, 2))        # back to NCHW


def _reference(x_nchw, weight3x3, stride, dilation):
    """Pure-JAX reference matching F.conv2d on the expanded RD buffer."""
    buf = _build_buffer(weight3x3)
    pad = 2 * dilation
    return jax.lax.conv_general_dilated(
        x_nchw, buf,
        window_strides=(stride, stride),
        padding=[(pad, pad), (pad, pad)],
        rhs_dilation=(dilation, dilation),
        dimension_numbers=("NCHW", "OIHW", "NCHW"),
    )


if __name__ == "__main__":
    key = jax.random.PRNGKey(0)
    kx, kw = jax.random.split(key)

    N, Cin, Cout, H, W = 2, 4, 8, 16, 16
    x = jax.random.normal(kx, (N, Cin, H, W), dtype=jnp.float32)

    # Deterministic kaiming_uniform_(a=sqrt(5)) equivalent: U(-b, b), b = 1/sqrt(fan_in)
    fan_in = Cin * 3 * 3
    bound = 1.0 / math.sqrt(fan_in)
    weight = jax.random.uniform(
        kw, (Cout, Cin, 3, 3), minval=-bound, maxval=bound, dtype=jnp.float32)

    # f32 matmul path (default): tight tolerance, dilation 1 and 2 (row tiling
    # + halo path exercised with row_tile=8 -> 2 row tiles).
    for dil in (1, 2):
        y = jax.block_until_ready(
            rdconv2d(x, weight, stride=1, dilation=dil, row_tile=8))
        y_ref = jax.block_until_ready(_reference(x, weight, 1, dil))
        assert y.shape == y_ref.shape, (dil, y.shape, y_ref.shape)
        err = float(jnp.max(jnp.abs(y - y_ref)))
        assert jnp.allclose(y, y_ref, atol=1e-4, rtol=1e-4), (dil, err)

    # bf16-input matmul (v6e/v7x MXU fast path), f32 accumulation -> looser tol.
    y_bf = jax.block_until_ready(
        rdconv2d(x, weight, stride=1, dilation=1, row_tile=8,
                 use_bf16_matmul=True))
    y_ref = jax.block_until_ready(_reference(x, weight, 1, 1))
    err_bf = float(jnp.max(jnp.abs(y_bf - y_ref)))
    assert jnp.allclose(y_bf, y_ref, atol=2e-2, rtol=2e-2), err_bf

    print("KERNEL_OK")
</pallas_src>

<mosaic_0001>
module attributes {stable_mosaic.version = 11 : i64} {
  func.func @kernel(%arg0: i32, %arg1: i32, %arg2: i32, %arg3: memref<1x8x20x4xf32, #tpu.memory_space<vmem>>, %arg4: memref<1x4x20x4xf32, #tpu.memory_space<vmem>>, %arg5: memref<32x128xf32, #tpu.memory_space<vmem>>, %arg6: memref<1x128x128xf32, #tpu.memory_space<vmem>>) attributes {dimension_semantics = [#tpu.dimension_semantics<parallel>, #tpu.dimension_semantics<parallel>, #tpu.dimension_semantics<parallel>], iteration_bounds = array<i64: 2, 1, 2>, scalar_prefetch = 0 : i64, scratch_operands = 0 : i64, tpu.core_type = #tpu.core_type<tc>, window_params = [{transform_indices = @transform_0, window_bounds = array<i64: 1, 8, 20, 4>}, {transform_indices = @transform_1, window_bounds = array<i64: 1, 4, 20, 4>}, {transform_indices = @transform_2, window_bounds = array<i64: 32, 128>}, {transform_indices = @transform_3, window_bounds = array<i64: 1, 128, 128>}]} {
    %c0 = arith.constant 0 : index
    %c0_0 = arith.constant 0 : index
    %c0_1 = arith.constant 0 : index
    %c0_2 = arith.constant 0 : index
    %0 = vector.load %arg3[%c0, %c0_0, %c0_1, %c0_2] : memref<1x8x20x4xf32, #tpu.memory_space<vmem>>, vector<1x8x20x4xf32>
    %1 = vector.shape_cast %0 : vector<1x8x20x4xf32> to vector<8x20x4xf32>
    %c0_3 = arith.constant 0 : index
    %c0_4 = arith.constant 0 : index
    %c0_5 = arith.constant 0 : index
    %c0_6 = arith.constant 0 : index
    %2 = vector.load %arg4[%c0_3, %c0_4, %c0_5, %c0_6] : memref<1x4x20x4xf32, #tpu.memory_space<vmem>>, vector<1x4x20x4xf32>
    %3 = vector.shape_cast %2 : vector<1x4x20x4xf32> to vector<4x20x4xf32>
    %4 = tpu.concatenate %1, %3 in 0 : vector<8x20x4xf32>, vector<4x20x4xf32> -> vector<12x20x4xf32>
    %5 = vector.extract_strided_slice %4 {offsets = [0, 0, 0], sizes = [8, 16, 4], strides = [1, 1, 1]} : vector<12x20x4xf32> to vector<8x16x4xf32>
    %6 = vector.extract_strided_slice %4 {offsets = [1, 1, 0], sizes = [8, 16, 4], strides = [1, 1, 1]} : vector<12x20x4xf32> to vector<8x16x4xf32>
    %7 = arith.subf %5, %6 : vector<8x16x4xf32>
    %8 = vector.extract_strided_slice %4 {offsets = [0, 2, 0], sizes = [8, 16, 4], strides = [1, 1, 1]} : vector<12x20x4xf32> to vector<8x16x4xf32>
    %9 = vector.extract_strided_slice %4 {offsets = [1, 2, 0], sizes = [8, 16, 4], strides = [1, 1, 1]} : vector<12x20x4xf32> to vector<8x16x4xf32>
    %10 = arith.subf %8, %9 : vector<8x16x4xf32>
    %11 = vector.extract_strided_slice %4 {offsets = [0, 4, 0], sizes = [8, 16, 4], strides = [1, 1, 1]} : vector<12x20x4xf32> to vector<8x16x4xf32>
    %12 = vector.extract_strided_slice %4 {offsets = [1, 3, 0], sizes = [8, 16, 4], strides = [1, 1, 1]} : vector<12x20x4xf32> to vector<8x16x4xf32>
    %13 = arith.subf %11, %12 : vector<8x16x4xf32>
    %14 = vector.extract_strided_slice %4 {offsets = [2, 0, 0], sizes = [8, 16, 4], strides = [1, 1, 1]} : vector<12x20x4xf32> to vector<8x16x4xf32>
    %15 = vector.extract_strided_slice %4 {offsets = [2, 1, 0], sizes = [8, 16, 4], strides = [1, 1, 1]} : vector<12x20x4xf32> to vector<8x16x4xf32>
    %16 = arith.subf %14, %15 : vector<8x16x4xf32>
    %17 = vector.extract_strided_slice %4 {offsets = [2, 4, 0], sizes = [8, 16, 4], strides = [1, 1, 1]} : vector<12x20x4xf32> to vector<8x16x4xf32>
    %18 = vector.extract_strided_slice %4 {offsets = [2, 3, 0], sizes = [8, 16, 4], strides = [1, 1, 1]} : vector<12x20x4xf32> to vector<8x16x4xf32>
    %19 = arith.subf %17, %18 : vector<8x16x4xf32>
    %20 = vector.extract_strided_slice %4 {offsets = [4, 0, 0], sizes = [8, 16, 4], strides = [1, 1, 1]} : vector<12x20x4xf32> to vector<8x16x4xf32>
    %21 = vector.extract_strided_slice %4 {offsets = [3, 1, 0], sizes = [8, 16, 4], strides = [1, 1, 1]} : vector<12x20x4xf32> to vector<8x16x4xf32>
    %22 = arith.subf %20, %21 : vector<8x16x4xf32>
    %23 = vector.extract_strided_slice %4 {offsets = [4, 2, 0], sizes = [8, 16, 4], strides = [1, 1, 1]} : vector<12x20x4xf32> to vector<8x16x4xf32>
    %24 = vector.extract_strided_slice %4 {offsets = [3, 2, 0], sizes = [8, 16, 4], strides = [1, 1, 1]} : vector<12x20x4xf32> to vector<8x16x4xf32>
    %25 = arith.subf %23, %24 : vector<8x16x4xf32>
    %26 = vector.extract_strided_slice %4 {offsets = [4, 4, 0], sizes = [8, 16, 4], strides = [1, 1, 1]} : vector<12x20x4xf32> to vector<8x16x4xf32>
    %27 = vector.extract_strided_slice %4 {offsets = [3, 3, 0], sizes = [8, 16, 4], strides = [1, 1, 1]} : vector<12x20x4xf32> to vector<8x16x4xf32>
    %28 = arith.subf %26, %27 : vector<8x16x4xf32>
    %29 = tpu.concatenate %7, %10, %13, %16, %19, %22, %25, %28 in 2 : vector<8x16x4xf32>, vector<8x16x4xf32>, vector<8x16x4xf32>, vector<8x16x4xf32>, vector<8x16x4xf32>, vector<8x16x4xf32>, vector<8x16x4xf32>, vector<8x16x4xf32> -> vector<8x16x32xf32>
    %30 = vector.shape_cast %29 : vector<8x16x32xf32> to vector<128x32xf32>
    %c0_7 = arith.constant 0 : index
    %c0_8 = arith.constant 0 : index
    %31 = vector.load %arg5[%c0_7, %c0_8] : memref<32x128xf32, #tpu.memory_space<vmem>>, vector<32x128xf32>
    %cst = arith.constant dense<0.000000e+00> : vector<128x128xf32>
    %32 = tpu.matmul %30, %31, %cst {dimension_numbers = #tpu.dot_dimension_numbers<[1], [0], [0], [1], [0, 0, 1, 1], [], []>} : vector<128x32xf32>, vector<32x128xf32>, vector<128x128xf32> -> vector<128x128xf32>
    %c0_9 = arith.constant 0 : index
    %c0_10 = arith.constant 0 : index
    %c0_11 = arith.constant 0 : index
    %33 = vector.load %arg6[%c0_9, %c0_10, %c0_11] : memref<1x128x128xf32, #tpu.memory_space<vmem>>, vector<1x128x128xf32>
    %34 = vector.shape_cast %33 : vector<1x128x128xf32> to vector<128x128xf32>
    %35 = vector.shape_cast %32 : vector<128x128xf32> to vector<1x128x128xf32>
    tpu.vector_store %arg6[%c0_9, %c0_10, %c0_11], %35 {strides = array<i32>} : memref<1x128x128xf32, #tpu.memory_space<vmem>>, vector<1x128x128xf32>,
    return
  }
  func.func @transform_0(%arg0: i32, %arg1: i32, %arg2: i32) -> (i32, i32, i32, i32) {
    %c0_i32 = arith.constant 0 : i32
    %c0_i32_0 = arith.constant 0 : i32
    %c0_i32_1 = arith.constant 0 : i32
    return %arg0, %arg2, %c0_i32, %c0_i32_0 : i32, i32, i32, i32
  }
  func.func @transform_1(%arg0: i32, %arg1: i32, %arg2: i32) -> (i32, i32, i32, i32) {
    %c1_i32 = arith.constant 1 : i32
    %0 = arith.addi %arg2, %c1_i32 : i32
    %c2_i32 = arith.constant 2 : i32
    %1 = arith.muli %0, %c2_i32 : i32
    %c0_i32 = arith.constant 0 : i32
    %c0_i32_0 = arith.constant 0 : i32
    %c0_i32_1 = arith.constant 0 : i32
    return %arg0, %1, %c0_i32, %c0_i32_0 : i32, i32, i32, i32
  }
  func.func @transform_2(%arg0: i32, %arg1: i32, %arg2: i32) -> (i32, i32) {
    %c0_i32 = arith.constant 0 : i32
    %c0_i32_0 = arith.constant 0 : i32
    return %c0_i32, %arg1 : i32, i32
  }
  func.func @transform_3(%arg0: i32, %arg1: i32, %arg2: i32) -> (i32, i32, i32) {
    %c0_i32 = arith.constant 0 : i32
    return %arg0, %arg2, %arg1 : i32, i32, i32
  }
}

</mosaic_0001>

<llo_original>
// kernel: tpu_custom_call.1
$region0: #{tpu_custom_call.1}
  #allocation0 [shape = 'u32[]', space=smem, size = 0x4, offset = 0x4, fixed_abs, tag = 'smem constant byte address 0x4 - core index']
  #allocation1 [shape = 'u32[144,128]{1,0:T(1,128)}', space=vmem, size = 0x12000, scoped, tag = 'internal scratch']
  %s0 = inlined_call_operand.vmem [shape: f32[2,24,20,4], index: 0, kind: input, shape index: {}]
  %s1 = inlined_call_operand.vmem [shape: f32[2,24,20,4], index: 1, kind: input, shape index: {}]
  %s2 = inlined_call_operand.vmem [shape: f32[32,128], index: 2, kind: input, shape index: {}]
  %s3 = inlined_call_operand.hbm [shape: f32[2,256,128], index: 3, kind: output, shape index: {}]
  %s4 = sld [smem:[#allocation0]]
  $region45: #{tpu_custom_call.1} parent=0
    _
  %s6 = ssub.s32 1, %s4
  %s7 = scalar_select 0, %s6, %s4
  $region1: #{tpu_custom_call.1} parent=0
    #allocation2 [shape = 'u8[131072]{0}', space=vmem, size = 0x20000, scoped, tag = 'output window, operand 0']
    #allocation3 [shape = 's32[2]{0}', space=sflag, size = 0x8, scoped, tag = 'scoped memory for tpu_custom_call.1']
    %8 = vsyncpa [#allocation3], 0
    %s9 = scalar_lea.sflag [#allocation3], 1
    %10 = vsyncpa %s9, 0
    loop: start=0, step=1, limit=6
    $region2: #{tpu_custom_call.1} parent=1 // loop_pre_header
      _
    $region3: #{tpu_custom_call.1} parent=1 // loop_header
      %s12 = sphi 0, %s16
      %p13 = scmp.ge.s32.totalorder %s12, 6
      %s19 = sphi 0, %s38
      %s20 = sphi 0, %s34
      %s21 = sphi 0, %s30
      %s22 = sphi 0, %s19
      %s23 = sphi 0, %s20
      %s24 = sphi 0, %s21
      %s25 = sphi 0, %s22
      %s26 = sphi 0, %s23
      %s27 = sphi 0, %s24
      %s43 = sphi 0, %s45
      %s46 = sphi 0, %s43
      %s47 = sphi 0, %s46
      %s63 = sphi 0, %s47
      %s75 = sphi 0, %s77
      %s78 = sphi 0, %s75
      %s79 = sphi 0, %s78
      %s95 = sphi 0, %s79
      %s101 = sphi 0, %s103
      %s104 = sphi 0, %s101
      %s105 = sphi 0, %s104
      %s121 = sphi 0, %s105
      %s131 = sphi 0, %s133
      %s134 = sphi 0, %s131
      %s135 = sphi 0, %s134
      %s151 = sphi 0, %s135
    $region4: #{tpu_custom_call.1} parent=1 // loop_header_branch
      %15 = sbr.rel (%p13) target = $region8
    $region5: #{tpu_custom_call.1} parent=1 // loop_body
      %s17 = ssub.s32 %s12, 1
      %s18 = ssub.s32 %s12, 2
      %s28 = sadd.s32 1, %s21
      %p29 = scmp.ge.s32.totalorder %s28, 2
      %s30 = scalar_select %p29, 0, %s28
      %s31 = sadd.s32 1, %s20
      %s32 = scalar_select %p29, %s31, %s20
      %p33 = scmp.ge.s32.totalorder %s32, 1
      %s34 = scalar_select %p33, 0, %s32
      %s35 = sadd.s32 1, %s19
      %s36 = scalar_select %p33, %s35, %s19
      %p37 = scmp.ge.s32.totalorder %s36, 2
      %s38 = scalar_select %p37, 0, %s36
      %s39 = ssub.s32 %s19, %s38
      %s40 = ssub.s32 %s21, %s30
      %s41 = sor.u32 %s39, %s40
      %p42 = scmp.eq.s32.totalorder %s41, 0
      %s44 = sadd.s32 %s43, 1
      %s45 = scalar_select %p42, %s43, %s44
      %p48 = pneg %p42
      %p49 = scmp.eq.s32.totalorder %s12, 3
      %p50 = por %p48, %p49
      %p51 = scmp.ne.s32.totalorder %s43, %s46
      %p52 = scmp.eq.s32.totalorder %s12, 0
      %p53 = por %p51, %p52
      %p54 = scmp.ne.s32.totalorder %s43, %s46
      %p55 = scmp.eq.s32.totalorder %s17, 3
      %p56 = por %p54, %p55
      %p57 = scmp.ne.s32.totalorder %s46, %s47
      %p58 = scmp.eq.s32.totalorder %s17, 0
      %p59 = por %p57, %p58
      %p60 = scmp.ne.s32.totalorder %s46, %s47
      %p61 = scmp.eq.s32.totalorder %s18, 3
      %p62 = por %p60, %p61
      %p64 = scmp.ne.s32.totalorder %s47, %s63
      %p65 = scmp.eq.s32.totalorder %s18, 0
      %p66 = por %p64, %p65
      %s67 = sadd.s32 %s21, 1
      %s68 = smul.u32 %s67, 2
      %s69 = sadd.s32 %s30, 1
      %s70 = smul.u32 %s69, 2
      %s71 = ssub.s32 %s19, %s38
      %s72 = ssub.s32 %s68, %s70
      %s73 = sor.u32 %s71, %s72
      %p74 = scmp.eq.s32.totalorder %s73, 0
      %s76 = sadd.s32 %s75, 1
      %s77 = scalar_select %p74, %s75, %s76
      %p80 = pneg %p74
      %p81 = scmp.eq.s32.totalorder %s12, 3
      %p82 = por %p80, %p81
      %p83 = scmp.ne.s32.totalorder %s75, %s78
      %p84 = scmp.eq.s32.totalorder %s12, 0
      %p85 = por %p83, %p84
      %p86 = scmp.ne.s32.totalorder %s75, %s78
      %p87 = scmp.eq.s32.totalorder %s17, 3
      %p88 = por %p86, %p87
      %p89 = scmp.ne.s32.totalorder %s78, %s79
      %p90 = scmp.eq.s32.totalorder %s17, 0
      %p91 = por %p89, %p90
      %p92 = scmp.ne.s32.totalorder %s78, %s79
      %p93 = scmp.eq.s32.totalorder %s18, 3
      %p94 = por %p92, %p93
      %p96 = scmp.ne.s32.totalorder %s79, %s95
      %p97 = scmp.eq.s32.totalorder %s18, 0
      %p98 = por %p96, %p97
      %s99 = ssub.s32 %s20, %s34
      %p100 = scmp.eq.s32.totalorder %s99, 0
      %s102 = sadd.s32 %s101, 1
      %s103 = scalar_select %p100, %s101, %s102
      %p106 = pneg %p100
      %p107 = scmp.eq.s32.totalorder %s12, 3
      %p108 = por %p106, %p107
      %p109 = scmp.ne.s32.totalorder %s101, %s104
      %p110 = scmp.eq.s32.totalorder %s12, 0
      %p111 = por %p109, %p110
      %p112 = scmp.ne.s32.totalorder %s101, %s104
      %p113 = scmp.eq.s32.totalorder %s17, 3
      %p114 = por %p112, %p113
      %p115 = scmp.ne.s32.totalorder %s104, %s105
      %p116 = scmp.eq.s32.totalorder %s17, 0
      %p117 = por %p115, %p116
      %p118 = scmp.ne.s32.totalorder %s104, %s105
      %p119 = scmp.eq.s32.totalorder %s18, 3
      %p120 = por %p118, %p119
      %p122 = scmp.ne.s32.totalorder %s105, %s121
      %p123 = scmp.eq.s32.totalorder %s18, 0
      %p124 = por %p122, %p123
      %s125 = ssub.s32 %s19, %s38
      %s126 = ssub.s32 %s21, %s30
      %s127 = sor.u32 %s125, %s126
      %s128 = ssub.s32 %s20, %s34
      %s129 = sor.u32 %s127, %s128
      %p130 = scmp.eq.s32.totalorder %s129, 0
      %s132 = sadd.s32 %s131, 1
      %s133 = scalar_select %p130, %s131, %s132
      %p136 = pneg %p130
      %p137 = scmp.eq.s32.totalorder %s12, 3
      %p138 = por %p136, %p137
      %p139 = scmp.ne.s32.totalorder %s131, %s134
      %p140 = scmp.eq.s32.totalorder %s12, 0
      %p141 = por %p139, %p140
      %p142 = scmp.ne.s32.totalorder %s131, %s134
      %p143 = scmp.eq.s32.totalorder %s17, 3
      %p144 = por %p142, %p143
      %p145 = scmp.ne.s32.totalorder %s134, %s135
      %p146 = scmp.eq.s32.totalorder %s17, 0
      %p147 = por %p145, %p146
      %p148 = scmp.ne.s32.totalorder %s134, %s135
      %p149 = scmp.eq.s32.totalorder %s18, 3
      %p150 = por %p148, %p149
      %p152 = scmp.ne.s32.totalorder %s135, %s151
      %p153 = scmp.eq.s32.totalorder %s18, 0
      %p154 = por %p152, %p153
      %p155 = scmp.le.s32.totalorder 1, %s12
      %p156 = scmp.lt.s32.totalorder %s12, 5
      %p157 = pnand %p155, %p156
      %p158 = pneg %p157
      // Predicated region
      $region9: #{tpu_custom_call.1} parent=5 // pred_check
        _
      $region10: #{tpu_custom_call.1} parent=5 // pred_check_branch
        %160 = sbr.rel (%p157) target = $region12
      $region11: #{tpu_custom_call.1} parent=5 // pred_region
        %s161 = ssub.s32 %s12, 1
        // Predicated region
        $region13: #{tpu_custom_call.1} parent=11 // pred_check
          %p162 = pneg %p117
        $region14: #{tpu_custom_call.1} parent=11 // pred_check_branch
          %164 = sbr.rel (%p162) target = $region16
        $region15: #{tpu_custom_call.1} parent=11 // pred_region
          %p165 = scmp.lt.s32.totalorder %s23, 0
          %s166 = scalar_select %p165, %s23, 0
          %s167 = smul.addr %s166, 8
          %s168 = scalar_lea.vmem %s2, %s167
        $region16: #{tpu_custom_call.1} parent=11 // pred_fallthru
          _
      $region12: #{tpu_custom_call.1} parent=5 // pred_fallthru
        _
      %p169 = scmp.lt.s32.totalorder %s12, 4
      // Predicated region
      $region17: #{tpu_custom_call.1} parent=5 // pred_check
        %p170 = pneg %p169
      $region18: #{tpu_custom_call.1} parent=5 // pred_check_branch
        %172 = sbr.rel (%p170) target = $region20
      $region19: #{tpu_custom_call.1} parent=5 // pred_region
        // Predicated region
        $region21: #{tpu_custom_call.1} parent=19 // pred_check
          %p173 = pneg %p53
        $region22: #{tpu_custom_call.1} parent=19 // pred_check_branch
          %175 = sbr.rel (%p173) target = $region24
        $region23: #{tpu_custom_call.1} parent=19 // pred_region
          %s176 = smul.u32 8, %s21
          %p177 = scmp.lt.s32.totalorder %s19, 1
          %s178 = scalar_select %p177, %s19, 1
          %p179 = scmp.lt.s32.totalorder %s176, 23
          %s180 = scalar_select %p179, %s176, 23
          %s181 = smul.addr %s180, 3
          %s182 = smul.addr %s178, 72
          %s183 = sadd.s32 %s181, %s182
          %s184 = smul.addr %s183, 8
          %s185 = scalar_lea.vmem %s0, %s184
          %s186 = smul.u32 8, %s21
        $region24: #{tpu_custom_call.1} parent=19 // pred_fallthru
          _
        // Predicated region
        $region25: #{tpu_custom_call.1} parent=19 // pred_check
          %p187 = pneg %p85
        $region26: #{tpu_custom_call.1} parent=19 // pred_check_branch
          %189 = sbr.rel (%p187) target = $region28
        $region27: #{tpu_custom_call.1} parent=19 // pred_region
          %s190 = sadd.s32 %s21, 1
          %s191 = smul.u32 %s190, 2
          %s192 = smul.u32 4, %s191
          %p193 = scmp.lt.s32.totalorder %s19, 1
          %s194 = scalar_select %p193, %s19, 1
          %p195 = scmp.lt.s32.totalorder %s192, 23
          %s196 = scalar_select %p195, %s192, 23
          %s197 = smul.addr %s196, 3
          %s198 = smul.addr %s194, 72
          %s199 = sadd.s32 %s197, %s198
          %s200 = smul.addr %s199, 8
          %s201 = scalar_lea.vmem %s1, %s200
          %s202 = sadd.s32 %s21, 1
          %s203 = smul.u32 %s202, 2
          %s204 = smul.u32 4, %s203
        $region28: #{tpu_custom_call.1} parent=19 // pred_fallthru
          _
      $region20: #{tpu_custom_call.1} parent=5 // pred_fallthru
        _
      %p205 = scmp.le.s32.totalorder 1, %s12
      %p206 = scmp.lt.s32.totalorder %s12, 5
      %p207 = pnand %p205, %p206
      %p208 = pneg %p207
      // Predicated region
      $region29: #{tpu_custom_call.1} parent=5 // pred_check
        _
      $region30: #{tpu_custom_call.1} parent=5 // pred_check_branch
        %210 = sbr.rel (%p207) target = $region32
      $region31: #{tpu_custom_call.1} parent=5 // pred_region
        %s211 = ssub.s32 %s12, 1
        %s212 = smul.u32 8, %s24
        %p213 = scmp.lt.s32.totalorder %s22, 1
        %s214 = scalar_select %p213, %s22, 1
        %p215 = scmp.lt.s32.totalorder %s212, 23
        %s216 = scalar_select %p215, %s212, 23
        %s217 = smul.addr %s216, 3
        %s218 = smul.addr %s214, 72
        %s219 = sadd.s32 %s217, %s218
        %s220 = smul.addr %s219, 8
        %s221 = scalar_lea.vmem %s0, %s220
        %p222 = pneg %p59
        %p223 = pneg %p56
        %s224 = sadd.s32 %s24, 1
        %s225 = smul.u32 %s224, 2
        %s226 = smul.u32 4, %s225
        %p227 = scmp.lt.s32.totalorder %s22, 1
        %s228 = scalar_select %p227, %s22, 1
        %p229 = scmp.lt.s32.totalorder %s226, 23
        %s230 = scalar_select %p229, %s226, 23
        %s231 = smul.addr %s230, 3
        %s232 = smul.addr %s228, 72
        %s233 = sadd.s32 %s231, %s232
        %s234 = smul.addr %s233, 8
        %s235 = scalar_lea.vmem %s1, %s234
        %p236 = pneg %p91
        %p237 = pneg %p88
        %p238 = scmp.lt.s32.totalorder %s23, 0
        %s239 = scalar_select %p238, %s23, 0
        %s240 = smul.addr %s239, 8
        %s241 = scalar_lea.vmem %s2, %s240
        %p242 = pneg %p117
        %p243 = pneg %p114
        %p244 = pneg %p147
        %p245 = pneg %p144
        %s246 = sand.u32 %s134, 1
        %s247 = scalar_lea.sflag [#allocation3], %s246
        %s248 = sand.u32 %s134, 1
        %s249 = smul.addr %s248, 128
        %s250 = scalar_lea.vmem [#allocation2], %s249
        %s251 = smul.u32 8, %s24
        %p252 = scmp.lt.s32.totalorder %s22, 1
        %s253 = scalar_select %p252, %s22, 1
        %p254 = scmp.lt.s32.totalorder %s251, 23
        %s255 = scalar_select %p254, %s251, 23
        %s256 = smul.addr %s255, 3
        %s257 = smul.addr %s253, 72
        %s258 = sadd.s32 %s256, %s257
        %s259 = smul.addr %s258, 8
        %s260 = scalar_lea.vmem %s0, %s259
        %s261 = smul.u32 8, %s24
        %s262 = sadd.s32 %s24, 1
        %s263 = smul.u32 %s262, 2
        %s264 = smul.u32 4, %s263
        %p265 = scmp.lt.s32.totalorder %s22, 1
        %s266 = scalar_select %p265, %s22, 1
        %p267 = scmp.lt.s32.totalorder %s264, 23
        %s268 = scalar_select %p267, %s264, 23
        %s269 = smul.addr %s268, 3
        %s270 = smul.addr %s266, 72
        %s271 = sadd.s32 %s269, %s270
        %s272 = smul.addr %s271, 8
        %s273 = scalar_lea.vmem %s1, %s272
        %s274 = sadd.s32 %s24, 1
        %s275 = smul.u32 %s274, 2
        %s276 = smul.u32 4, %s275
        %p277 = scmp.lt.s32.totalorder %s23, 0
        %s278 = scalar_select %p277, %s23, 0
        %s279 = smul.addr %s278, 8
        %s280 = scalar_lea.vmem %s2, %s279
        %s281 = smul.u32 16, %s24
        %v282 = vld [vmem:[%s260] sm:$0xff]
        %v283 = vld [vmem:[%s260 + $0x8] sm:$0xff]
        %v284 = vld [vmem:[%s260 + $0x10] sm:$0xf]
        %v285 = vld [vmem:[%s260 + $0x18] sm:$0xff]
        %v286 = vld [vmem:[%s260 + $0x20] sm:$0xff]
        %v287 = vld [vmem:[%s260 + $0x28] sm:$0xf]
        %v288 = vld [vmem:[%s260 + $0x30] sm:$0xff]
        %v289 = vld [vmem:[%s260 + $0x38] sm:$0xff]
        %v290 = vld [vmem:[%s260 + $0x40] sm:$0xf]
        %v291 = vld [vmem:[%s260 + $0x48] sm:$0xff]
        %v292 = vld [vmem:[%s260 + $0x50] sm:$0xff]
        %v293 = vld [vmem:[%s260 + $0x58] sm:$0xf]
        %v294 = vld [vmem:[%s260 + $0x60] sm:$0xff]
        %v295 = vld [vmem:[%s260 + $0x68] sm:$0xff]
        %v296 = vld [vmem:[%s260 + $0x70] sm:$0xf]
        %v297 = vld [vmem:[%s260 + $0x78] sm:$0xff]
        %v298 = vld [vmem:[%s260 + $0x80] sm:$0xff]
        %v299 = vld [vmem:[%s260 + $0x88] sm:$0xf]
        %v300 = vld [vmem:[%s260 + $0x90] sm:$0xff]
        %v301 = vld [vmem:[%s260 + $0x98] sm:$0xff]
        %v302 = vld [vmem:[%s260 + $0xa0] sm:$0xf]
        %v303 = vld [vmem:[%s260 + $0xa8] sm:$0xff]
        %v304 = vld [vmem:[%s260 + $0xb0] sm:$0xff]
        %v305 = vld [vmem:[%s260 + $0xb8] sm:$0xf]
        %v306 = vld [vmem:[%s273] sm:$0xff]
        %v307 = vld [vmem:[%s273 + $0x8] sm:$0xff]
        %v308 = vld [vmem:[%s273 + $0x10] sm:$0xf]
        %v309 = vld [vmem:[%s273 + $0x18] sm:$0xff]
        %v310 = vld [vmem:[%s273 + $0x20] sm:$0xff]
        %v311 = vld [vmem:[%s273 + $0x28] sm:$0xf]
        %v312 = vld [vmem:[%s273 + $0x30] sm:$0xff]
        %v313 = vld [vmem:[%s273 + $0x38] sm:$0xff]
        %v314 = vld [vmem:[%s273 + $0x40] sm:$0xf]
        %v315 = vld [vmem:[%s273 + $0x48] sm:$0xff]
        %v316 = vld [vmem:[%s273 + $0x50] sm:$0xff]
        %v317 = vld [vmem:[%s273 + $0x58] sm:$0xf]
        %vm342 = vcmask 1046528
        %v343 = vrot.slane %v285, 1
        %v344 = vrot.slane %v286, 1
        %v345 = vsel %vm342, %v343, %v344
        %v346 = vrot.slane %v287, 1
        %v347 = vsel %vm342, %v344, %v346
        %v348 = vrot.slane %v288, 1
        %v349 = vrot.slane %v289, 1
        %v350 = vsel %vm342, %v348, %v349
        %v351 = vrot.slane %v290, 1
        %v352 = vsel %vm342, %v349, %v351
        %v353 = vrot.slane %v291, 1
        %v354 = vrot.slane %v292, 1
        %v355 = vsel %vm342, %v353, %v354
        %v356 = vrot.slane %v293, 1
        %v357 = vsel %vm342, %v354, %v356
        %v358 = vrot.slane %v294, 1
        %v359 = vrot.slane %v295, 1
        %v360 = vsel %vm342, %v358, %v359
        %v361 = vrot.slane %v296, 1
        %v362 = vsel %vm342, %v359, %v361
        %v363 = vrot.slane %v297, 1
        %v364 = vrot.slane %v298, 1
        %v365 = vsel %vm342, %v363, %v364
        %v366 = vrot.slane %v299, 1
        %v367 = vsel %vm342, %v364, %v366
        %v368 = vrot.slane %v300, 1
        %v369 = vrot.slane %v301, 1
        %v370 = vsel %vm342, %v368, %v369
        %v371 = vrot.slane %v302, 1
        %v372 = vsel %vm342, %v369, %v371
        %v373 = vrot.slane %v303, 1
        %v374 = vrot.slane %v304, 1
        %v375 = vsel %vm342, %v373, %v374
        %v376 = vrot.slane %v305, 1
        %v377 = vsel %vm342, %v374, %v376
        %v378 = vrot.slane %v306, 1
        %v379 = vrot.slane %v307, 1
        %v380 = vsel %vm342, %v378, %v379
        %v381 = vrot.slane %v308, 1
        %v382 = vsel %vm342, %v379, %v381
        %v399 = vsub.f32 %v282, %v345
        %v400 = vsub.f32 %v283, %v347
        %v401 = vsub.f32 %v285, %v350
        %v402 = vsub.f32 %v286, %v352
        %v403 = vsub.f32 %v288, %v355
        %v404 = vsub.f32 %v289, %v357
        %v405 = vsub.f32 %v291, %v360
        %v406 = vsub.f32 %v292, %v362
        %v407 = vsub.f32 %v294, %v365
        %v408 = vsub.f32 %v295, %v367
        %v409 = vsub.f32 %v297, %v370
        %v410 = vsub.f32 %v298, %v372
        %v411 = vsub.f32 %v300, %v375
        %v412 = vsub.f32 %v301, %v377
        %v413 = vsub.f32 %v303, %v380
        %v414 = vsub.f32 %v304, %v382
        %v415 = vsub.f32 %v282, %v285
        %v416 = vsub.f32 %v283, %v286
        %v417 = vsub.f32 %v284, %v287
        %v418 = vsub.f32 %v285, %v288
        %v419 = vsub.f32 %v286, %v289
        %v420 = vsub.f32 %v287, %v290
        %v421 = vsub.f32 %v288, %v291
        %v422 = vsub.f32 %v289, %v292
        %v423 = vsub.f32 %v290, %v293
        %v424 = vsub.f32 %v291, %v294
        %v425 = vsub.f32 %v292, %v295
        %v426 = vsub.f32 %v293, %v296
        %v427 = vsub.f32 %v294, %v297
        %v428 = vsub.f32 %v295, %v298
        %v429 = vsub.f32 %v296, %v299
        %v430 = vsub.f32 %v297, %v300
        %v431 = vsub.f32 %v298, %v301
        %v432 = vsub.f32 %v299, %v302
        %v433 = vsub.f32 %v300, %v303
        %v434 = vsub.f32 %v301, %v304
        %v435 = vsub.f32 %v302, %v305
        %v436 = vsub.f32 %v303, %v306
        %v437 = vsub.f32 %v304, %v307
        %v438 = vsub.f32 %v305, %v308
        %vm439 = vcmask 1040384
        %v440 = vrot.slane %v285, 7
        %v441 = vrot.slane %v286, 7
        %v442 = vsel %vm439, %v440, %v441
        %v443 = vrot.slane %v287, 7
        %v444 = vsel %vm439, %v441, %v443
        %v445 = vrot.slane %v288, 7
        %v446 = vrot.slane %v289, 7
        %v447 = vsel %vm439, %v445, %v446
        %v448 = vrot.slane %v290, 7
        %v449 = vsel %vm439, %v446, %v448
        %v450 = vrot.slane %v291, 7
        %v451 = vrot.slane %v292, 7
        %v452 = vsel %vm439, %v450, %v451
        %v453 = vrot.slane %v293, 7
        %v454 = vsel %vm439, %v451, %v453
        %v455 = vrot.slane %v294, 7
        %v456 = vrot.slane %v295, 7
        %v457 = vsel %vm439, %v455, %v456
        %v458 = vrot.slane %v296, 7
        %v459 = vsel %vm439, %v456, %v458
        %v460 = vrot.slane %v297, 7
        %v461 = vrot.slane %v298, 7
        %v462 = vsel %vm439, %v460, %v461
        %v463 = vrot.slane %v299, 7
        %v464 = vsel %vm439, %v461, %v463
        %v465 = vrot.slane %v300, 7
        %v466 = vrot.slane %v301, 7
        %v467 = vsel %vm439, %v465, %v466
        %v468 = vrot.slane %v302, 7
        %v469 = vsel %vm439, %v466, %v468
        %v470 = vrot.slane %v303, 7
        %v471 = vrot.slane %v304, 7
        %v472 = vsel %vm439, %v470, %v471
        %v473 = vrot.slane %v305, 7
        %v474 = vsel %vm439, %v471, %v473
        %v475 = vrot.slane %v306, 7
        %v476 = vrot.slane %v307, 7
        %v477 = vsel %vm439, %v475, %v476
        %v478 = vrot.slane %v308, 7
        %v479 = vsel %vm439, %v476, %v478
        %v504 = vsub.f32 %v282, %v440
        %v505 = vsub.f32 %v283, %v442
        %v506 = vsub.f32 %v284, %v444
        %v507 = vsub.f32 %v285, %v445
        %v508 = vsub.f32 %v286, %v447
        %v509 = vsub.f32 %v287, %v449
        %v510 = vsub.f32 %v288, %v450
        %v511 = vsub.f32 %v289, %v452
        %v512 = vsub.f32 %v290, %v454
        %v513 = vsub.f32 %v291, %v455
        %v514 = vsub.f32 %v292, %v457
        %v515 = vsub.f32 %v293, %v459
        %v516 = vsub.f32 %v294, %v460
        %v517 = vsub.f32 %v295, %v462
        %v518 = vsub.f32 %v296, %v464
        %v519 = vsub.f32 %v297, %v465
        %v520 = vsub.f32 %v298, %v467
        %v521 = vsub.f32 %v299, %v469
        %v522 = vsub.f32 %v300, %v470
        %v523 = vsub.f32 %v301, %v472
        %v524 = vsub.f32 %v302, %v474
        %v525 = vsub.f32 %v303, %v475
        %v526 = vsub.f32 %v304, %v477
        %v527 = vsub.f32 %v305, %v479
        %v531 = vrot.slane %v309, 1
        %v532 = vrot.slane %v310, 1
        %v533 = vsel %vm342, %v531, %v532
        %v534 = vrot.slane %v311, 1
        %v535 = vsel %vm342, %v532, %v534
        %v538 = vsub.f32 %v288, %v350
        %v539 = vsub.f32 %v289, %v352
        %v540 = vsub.f32 %v291, %v355
        %v541 = vsub.f32 %v292, %v357
        %v542 = vsub.f32 %v294, %v360
        %v543 = vsub.f32 %v295, %v362
        %v544 = vsub.f32 %v297, %v365
        %v545 = vsub.f32 %v298, %v367
        %v546 = vsub.f32 %v300, %v370
        %v547 = vsub.f32 %v301, %v372
        %v548 = vsub.f32 %v303, %v375
        %v549 = vsub.f32 %v304, %v377
        %v550 = vsub.f32 %v306, %v380
        %v551 = vsub.f32 %v307, %v382
        %v552 = vsub.f32 %v309, %v533
        %v553 = vsub.f32 %v310, %v535
        %v554 = vrot.slane %v309, 7
        %v555 = vrot.slane %v310, 7
        %v556 = vsel %vm439, %v554, %v555
        %v557 = vrot.slane %v311, 7
        %v558 = vsel %vm439, %v555, %v557
        %v562 = vsub.f32 %v288, %v445
        %v563 = vsub.f32 %v289, %v447
        %v564 = vsub.f32 %v290, %v449
        %v565 = vsub.f32 %v291, %v450
        %v566 = vsub.f32 %v292, %v452
        %v567 = vsub.f32 %v293, %v454
        %v568 = vsub.f32 %v294, %v455
        %v569 = vsub.f32 %v295, %v457
        %v570 = vsub.f32 %v296, %v459
        %v571 = vsub.f32 %v297, %v460
        %v572 = vsub.f32 %v298, %v462
        %v573 = vsub.f32 %v299, %v464
        %v574 = vsub.f32 %v300, %v465
        %v575 = vsub.f32 %v301, %v467
        %v576 = vsub.f32 %v302, %v469
        %v577 = vsub.f32 %v303, %v470
        %v578 = vsub.f32 %v304, %v472
        %v579 = vsub.f32 %v305, %v474
        %v580 = vsub.f32 %v306, %v475
        %v581 = vsub.f32 %v307, %v477
        %v582 = vsub.f32 %v308, %v479
        %v583 = vsub.f32 %v309, %v554
        %v584 = vsub.f32 %v310, %v556
        %v585 = vsub.f32 %v311, %v558
        %v589 = vrot.slane %v312, 1
        %v590 = vrot.slane %v313, 1
        %v591 = vsel %vm342, %v589, %v590
        %v592 = vrot.slane %v314, 1
        %v593 = vsel %vm342, %v590, %v592
        %v596 = vsub.f32 %v294, %v355
        %v597 = vsub.f32 %v295, %v357
        %v598 = vsub.f32 %v297, %v360
        %v599 = vsub.f32 %v298, %v362
        %v600 = vsub.f32 %v300, %v365
        %v601 = vsub.f32 %v301, %v367
        %v602 = vsub.f32 %v303, %v370
        %v603 = vsub.f32 %v304, %v372
        %v604 = vsub.f32 %v306, %v375
        %v605 = vsub.f32 %v307, %v377
        %v606 = vsub.f32 %v309, %v380
        %v607 = vsub.f32 %v310, %v382
        %v608 = vsub.f32 %v312, %v533
        %v609 = vsub.f32 %v313, %v535
        %v610 = vsub.f32 %v315, %v591
        %v611 = vsub.f32 %v316, %v593
        %v612 = vsub.f32 %v294, %v291
        %v613 = vsub.f32 %v295, %v292
        %v614 = vsub.f32 %v296, %v293
        %v615 = vsub.f32 %v297, %v294
        %v616 = vsub.f32 %v298, %v295
        %v617 = vsub.f32 %v299, %v296
        %v618 = vsub.f32 %v300, %v297
        %v619 = vsub.f32 %v301, %v298
        %v620 = vsub.f32 %v302, %v299
        %v621 = vsub.f32 %v303, %v300
        %v622 = vsub.f32 %v304, %v301
        %v623 = vsub.f32 %v305, %v302
        %v624 = vsub.f32 %v306, %v303
        %v625 = vsub.f32 %v307, %v304
        %v626 = vsub.f32 %v308, %v305
        %v627 = vsub.f32 %v309, %v306
        %v628 = vsub.f32 %v310, %v307
        %v629 = vsub.f32 %v311, %v308
        %v630 = vsub.f32 %v312, %v309
        %v631 = vsub.f32 %v313, %v310
        %v632 = vsub.f32 %v314, %v311
        %v633 = vsub.f32 %v315, %v312
        %v634 = vsub.f32 %v316, %v313
        %v635 = vsub.f32 %v317, %v314
        %v636 = vrot.slane %v312, 7
        %v637 = vrot.slane %v313, 7
        %v638 = vsel %vm439, %v636, %v637
        %v639 = vrot.slane %v314, 7
        %v640 = vsel %vm439, %v637, %v639
        %v644 = vsub.f32 %v294, %v450
        %v645 = vsub.f32 %v295, %v452
        %v646 = vsub.f32 %v296, %v454
        %v647 = vsub.f32 %v297, %v455
        %v648 = vsub.f32 %v298, %v457
        %v649 = vsub.f32 %v299, %v459
        %v650 = vsub.f32 %v300, %v460
        %v651 = vsub.f32 %v301, %v462
        %v652 = vsub.f32 %v302, %v464
        %v653 = vsub.f32 %v303, %v465
        %v654 = vsub.f32 %v304, %v467
        %v655 = vsub.f32 %v305, %v469
        %v656 = vsub.f32 %v306, %v470
        %v657 = vsub.f32 %v307, %v472
        %v658 = vsub.f32 %v308, %v474
        %v659 = vsub.f32 %v309, %v475
        %v660 = vsub.f32 %v310, %v477
        %v661 = vsub.f32 %v311, %v479
        %v662 = vsub.f32 %v312, %v554
        %v663 = vsub.f32 %v313, %v556
        %v664 = vsub.f32 %v314, %v558
        %v665 = vsub.f32 %v315, %v636
        %v666 = vsub.f32 %v316, %v638
        %v667 = vsub.f32 %v317, %v640
        %vm692 = vcmask 1045504
        %v693 = vrot.slane %v415, 2
        %v694 = vrot.slane %v416, 2
        %v695 = vsel %vm692, %v693, %v694
        %v696 = vrot.slane %v417, 2
        %v697 = vsel %vm692, %v694, %v696
        %v698 = vrot.slane %v418, 2
        %v699 = vrot.slane %v419, 2
        %v700 = vsel %vm692, %v698, %v699
        %v701 = vrot.slane %v420, 2
        %v702 = vsel %vm692, %v699, %v701
        %v703 = vrot.slane %v421, 2
        %v704 = vrot.slane %v422, 2
        %v705 = vsel %vm692, %v703, %v704
        %v706 = vrot.slane %v423, 2
        %v707 = vsel %vm692, %v704, %v706
        %v708 = vrot.slane %v424, 2
        %v709 = vrot.slane %v425, 2
        %v710 = vsel %vm692, %v708, %v709
        %v711 = vrot.slane %v426, 2
        %v712 = vsel %vm692, %v709, %v711
        %v713 = vrot.slane %v427, 2
        %v714 = vrot.slane %v428, 2
        %v715 = vsel %vm692, %v713, %v714
        %v716 = vrot.slane %v429, 2
        %v717 = vsel %vm692, %v714, %v716
        %v718 = vrot.slane %v430, 2
        %v719 = vrot.slane %v431, 2
        %v720 = vsel %vm692, %v718, %v719
        %v721 = vrot.slane %v432, 2
        %v722 = vsel %vm692, %v719, %v721
        %v723 = vrot.slane %v433, 2
        %v724 = vrot.slane %v434, 2
        %v725 = vsel %vm692, %v723, %v724
        %v726 = vrot.slane %v435, 2
        %v727 = vsel %vm692, %v724, %v726
        %v728 = vrot.slane %v436, 2
        %v729 = vrot.slane %v437, 2
        %v730 = vsel %vm692, %v728, %v729
        %v731 = vrot.slane %v438, 2
        %v732 = vsel %vm692, %v729, %v731
        %733 = vrot.lane.b32.xlu0 %v695, 4
        %v734 = vpop.permute.xlu0 %733
        %735 = vrot.lane.b32.xlu0 %v697, 4
        %v736 = vpop.permute.xlu0 %735
        %737 = vrot.lane.b32.xlu0 %v700, 4
        %v738 = vpop.permute.xlu0 %737
        %739 = vrot.lane.b32.xlu0 %v702, 4
        %v740 = vpop.permute.xlu0 %739
        %741 = vrot.lane.b32.xlu0 %v705, 4
        %v742 = vpop.permute.xlu0 %741
        %743 = vrot.lane.b32.xlu0 %v707, 4
        %v744 = vpop.permute.xlu0 %743
        %745 = vrot.lane.b32.xlu0 %v710, 4
        %v746 = vpop.permute.xlu0 %745
        %747 = vrot.lane.b32.xlu0 %v712, 4
        %v748 = vpop.permute.xlu0 %747
        %749 = vrot.lane.b32.xlu0 %v715, 4
        %v750 = vpop.permute.xlu0 %749
        %751 = vrot.lane.b32.xlu0 %v717, 4
        %v752 = vpop.permute.xlu0 %751
        %753 = vrot.lane.b32.xlu0 %v720, 4
        %v754 = vpop.permute.xlu0 %753
        %755 = vrot.lane.b32.xlu0 %v722, 4
        %v756 = vpop.permute.xlu0 %755
        %757 = vrot.lane.b32.xlu0 %v725, 4
        %v758 = vpop.permute.xlu0 %757
        %759 = vrot.lane.b32.xlu0 %v727, 4
        %v760 = vpop.permute.xlu0 %759
        %761 = vrot.lane.b32.xlu0 %v730, 4
        %v762 = vpop.permute.xlu0 %761
        %763 = vrot.lane.b32.xlu0 %v732, 4
        %v764 = vpop.permute.xlu0 %763
        %vm805 = vcmask 1043456
        %v806 = vrot.slane %v504, 4
        %v807 = vrot.slane %v505, 4
        %v808 = vsel %vm805, %v806, %v807
        %v809 = vrot.slane %v506, 4
        %v810 = vsel %vm805, %v807, %v809
        %v811 = vrot.slane %v507, 4
        %v812 = vrot.slane %v508, 4
        %v813 = vsel %vm805, %v811, %v812
        %v814 = vrot.slane %v509, 4
        %v815 = vsel %vm805, %v812, %v814
        %v816 = vrot.slane %v510, 4
        %v817 = vrot.slane %v511, 4
        %v818 = vsel %vm805, %v816, %v817
        %v819 = vrot.slane %v512, 4
        %v820 = vsel %vm805, %v817, %v819
        %v821 = vrot.slane %v513, 4
        %v822 = vrot.slane %v514, 4
        %v823 = vsel %vm805, %v821, %v822
        %v824 = vrot.slane %v515, 4
        %v825 = vsel %vm805, %v822, %v824
        %v826 = vrot.slane %v516, 4
        %v827 = vrot.slane %v517, 4
        %v828 = vsel %vm805, %v826, %v827
        %v829 = vrot.slane %v518, 4
        %v830 = vsel %vm805, %v827, %v829
        %v831 = vrot.slane %v519, 4
        %v832 = vrot.slane %v520, 4
        %v833 = vsel %vm805, %v831, %v832
        %v834 = vrot.slane %v521, 4
        %v835 = vsel %vm805, %v832, %v834
        %v836 = vrot.slane %v522, 4
        %v837 = vrot.slane %v523, 4
        %v838 = vsel %vm805, %v836, %v837
        %v839 = vrot.slane %v524, 4
        %v840 = vsel %vm805, %v837, %v839
        %v841 = vrot.slane %v525, 4
        %v842 = vrot.slane %v526, 4
        %v843 = vsel %vm805, %v841, %v842
        %v844 = vrot.slane %v527, 4
        %v845 = vsel %vm805, %v842, %v844
        %846 = vrot.lane.b32.xlu0 %v808, 8
        %v847 = vpop.permute.xlu0 %846
        %848 = vrot.lane.b32.xlu0 %v810, 8
        %v849 = vpop.permute.xlu0 %848
        %850 = vrot.lane.b32.xlu0 %v813, 8
        %v851 = vpop.permute.xlu0 %850
        %852 = vrot.lane.b32.xlu0 %v815, 8
        %v853 = vpop.permute.xlu0 %852
        %854 = vrot.lane.b32.xlu0 %v818, 8
        %v855 = vpop.permute.xlu0 %854
        %856 = vrot.lane.b32.xlu0 %v820, 8
        %v857 = vpop.permute.xlu0 %856
        %858 = vrot.lane.b32.xlu0 %v823, 8
        %v859 = vpop.permute.xlu0 %858
        %860 = vrot.lane.b32.xlu0 %v825, 8
        %v861 = vpop.permute.xlu0 %860
        %862 = vrot.lane.b32.xlu0 %v828, 8
        %v863 = vpop.permute.xlu0 %862
        %864 = vrot.lane.b32.xlu0 %v830, 8
        %v865 = vpop.permute.xlu0 %864
        %866 = vrot.lane.b32.xlu0 %v833, 8
        %v867 = vpop.permute.xlu0 %866
        %868 = vrot.lane.b32.xlu0 %v835, 8
        %v869 = vpop.permute.xlu0 %868
        %870 = vrot.lane.b32.xlu0 %v838, 8
        %v871 = vpop.permute.xlu0 %870
        %872 = vrot.lane.b32.xlu0 %v840, 8
        %v873 = vpop.permute.xlu0 %872
        %874 = vrot.lane.b32.xlu0 %v843, 8
        %v875 = vpop.permute.xlu0 %874
        %876 = vrot.lane.b32.xlu0 %v845, 8
        %v877 = vpop.permute.xlu0 %876
        %910 = vrot.lane.b32.xlu0 %v538, 12
        %v911 = vpop.permute.xlu0 %910
        %912 = vrot.lane.b32.xlu0 %v539, 12
        %v913 = vpop.permute.xlu0 %912
        %914 = vrot.lane.b32.xlu0 %v540, 12
        %v915 = vpop.permute.xlu0 %914
        %916 = vrot.lane.b32.xlu0 %v541, 12
        %v917 = vpop.permute.xlu0 %916
        %918 = vrot.lane.b32.xlu0 %v542, 12
        %v919 = vpop.permute.xlu0 %918
        %920 = vrot.lane.b32.xlu0 %v543, 12
        %v921 = vpop.permute.xlu0 %920
        %922 = vrot.lane.b32.xlu0 %v544, 12
        %v923 = vpop.permute.xlu0 %922
        %924 = vrot.lane.b32.xlu0 %v545, 12
        %v925 = vpop.permute.xlu0 %924
        %926 = vrot.lane.b32.xlu0 %v546, 12
        %v927 = vpop.permute.xlu0 %926
        %928 = vrot.lane.b32.xlu0 %v547, 12
        %v929 = vpop.permute.xlu0 %928
        %930 = vrot.lane.b32.xlu0 %v548, 12
        %v931 = vpop.permute.xlu0 %930
        %932 = vrot.lane.b32.xlu0 %v549, 12
        %v933 = vpop.permute.xlu0 %932
        %934 = vrot.lane.b32.xlu0 %v550, 12
        %v935 = vpop.permute.xlu0 %934
        %936 = vrot.lane.b32.xlu0 %v551, 12
        %v937 = vpop.permute.xlu0 %936
        %938 = vrot.lane.b32.xlu0 %v552, 12
        %v939 = vpop.permute.xlu0 %938
        %940 = vrot.lane.b32.xlu0 %v553, 12
        %v941 = vpop.permute.xlu0 %940
        %v982 = vrot.slane %v562, 4
        %v983 = vrot.slane %v563, 4
        %v984 = vsel %vm805, %v982, %v983
        %v985 = vrot.slane %v564, 4
        %v986 = vsel %vm805, %v983, %v985
        %v987 = vrot.slane %v565, 4
        %v988 = vrot.slane %v566, 4
        %v989 = vsel %vm805, %v987, %v988
        %v990 = vrot.slane %v567, 4
        %v991 = vsel %vm805, %v988, %v990
        %v992 = vrot.slane %v568, 4
        %v993 = vrot.slane %v569, 4
        %v994 = vsel %vm805, %v992, %v993
        %v995 = vrot.slane %v570, 4
        %v996 = vsel %vm805, %v993, %v995
        %v997 = vrot.slane %v571, 4
        %v998 = vrot.slane %v572, 4
        %v999 = vsel %vm805, %v997, %v998
        %v1000 = vrot.slane %v573, 4
        %v1001 = vsel %vm805, %v998, %v1000
        %v1002 = vrot.slane %v574, 4
        %v1003 = vrot.slane %v575, 4
        %v1004 = vsel %vm805, %v1002, %v1003
        %v1005 = vrot.slane %v576, 4
        %v1006 = vsel %vm805, %v1003, %v1005
        %v1007 = vrot.slane %v577, 4
        %v1008 = vrot.slane %v578, 4
        %v1009 = vsel %vm805, %v1007, %v1008
        %v1010 = vrot.slane %v579, 4
        %v1011 = vsel %vm805, %v1008, %v1010
        %v1012 = vrot.slane %v580, 4
        %v1013 = vrot.slane %v581, 4
        %v1014 = vsel %vm805, %v1012, %v1013
        %v1015 = vrot.slane %v582, 4
        %v1016 = vsel %vm805, %v1013, %v1015
        %v1017 = vrot.slane %v583, 4
        %v1018 = vrot.slane %v584, 4
        %v1019 = vsel %vm805, %v1017, %v1018
        %v1020 = vrot.slane %v585, 4
        %v1021 = vsel %vm805, %v1018, %v1020
        %1022 = vrot.lane.b32.xlu0 %v984, 16
        %v1023 = vpop.permute.xlu0 %1022
        %1024 = vrot.lane.b32.xlu0 %v986, 16
        %v1025 = vpop.permute.xlu0 %1024
        %1026 = vrot.lane.b32.xlu0 %v989, 16
        %v1027 = vpop.permute.xlu0 %1026
        %1028 = vrot.lane.b32.xlu0 %v991, 16
        %v1029 = vpop.permute.xlu0 %1028
        %1030 = vrot.lane.b32.xlu0 %v994, 16
        %v1031 = vpop.permute.xlu0 %1030
        %1032 = vrot.lane.b32.xlu0 %v996, 16
        %v1033 = vpop.permute.xlu0 %1032
        %1034 = vrot.lane.b32.xlu0 %v999, 16
        %v1035 = vpop.permute.xlu0 %1034
        %1036 = vrot.lane.b32.xlu0 %v1001, 16
        %v1037 = vpop.permute.xlu0 %1036
        %1038 = vrot.lane.b32.xlu0 %v1004, 16
        %v1039 = vpop.permute.xlu0 %1038
        %1040 = vrot.lane.b32.xlu0 %v1006, 16
        %v1041 = vpop.permute.xlu0 %1040
        %1042 = vrot.lane.b32.xlu0 %v1009, 16
        %v1043 = vpop.permute.xlu0 %1042
        %1044 = vrot.lane.b32.xlu0 %v1011, 16
        %v1045 = vpop.permute.xlu0 %1044
        %1046 = vrot.lane.b32.xlu0 %v1014, 16
        %v1047 = vpop.permute.xlu0 %1046
        %1048 = vrot.lane.b32.xlu0 %v1016, 16
        %v1049 = vpop.permute.xlu0 %1048
        %1050 = vrot.lane.b32.xlu0 %v1019, 16
        %v1051 = vpop.permute.xlu0 %1050
        %1052 = vrot.lane.b32.xlu0 %v1021, 16
        %v1053 = vpop.permute.xlu0 %1052
        %1086 = vrot.lane.b32.xlu0 %v596, 20
        %v1087 = vpop.permute.xlu0 %1086
        %1088 = vrot.lane.b32.xlu0 %v597, 20
        %v1089 = vpop.permute.xlu0 %1088
        %1090 = vrot.lane.b32.xlu0 %v598, 20
        %v1091 = vpop.permute.xlu0 %1090
        %1092 = vrot.lane.b32.xlu0 %v599, 20
        %v1093 = vpop.permute.xlu0 %1092
        %1094 = vrot.lane.b32.xlu0 %v600, 20
        %v1095 = vpop.permute.xlu0 %1094
        %1096 = vrot.lane.b32.xlu0 %v601, 20
        %v1097 = vpop.permute.xlu0 %1096
        %1098 = vrot.lane.b32.xlu0 %v602, 20
        %v1099 = vpop.permute.xlu0 %1098
        %1100 = vrot.lane.b32.xlu0 %v603, 20
        %v1101 = vpop.permute.xlu0 %1100
        %1102 = vrot.lane.b32.xlu0 %v604, 20
        %v1103 = vpop.permute.xlu0 %1102
        %1104 = vrot.lane.b32.xlu0 %v605, 20
        %v1105 = vpop.permute.xlu0 %1104
        %1106 = vrot.lane.b32.xlu0 %v606, 20
        %v1107 = vpop.permute.xlu0 %1106
        %1108 = vrot.lane.b32.xlu0 %v607, 20
        %v1109 = vpop.permute.xlu0 %1108
        %1110 = vrot.lane.b32.xlu0 %v608, 20
        %v1111 = vpop.permute.xlu0 %1110
        %1112 = vrot.lane.b32.xlu0 %v609, 20
        %v1113 = vpop.permute.xlu0 %1112
        %1114 = vrot.lane.b32.xlu0 %v610, 20
        %v1115 = vpop.permute.xlu0 %1114
        %1116 = vrot.lane.b32.xlu0 %v611, 20
        %v1117 = vpop.permute.xlu0 %1116
        %v1158 = vrot.slane %v612, 2
        %v1159 = vrot.slane %v613, 2
        %v1160 = vsel %vm692, %v1158, %v1159
        %v1161 = vrot.slane %v614, 2
        %v1162 = vsel %vm692, %v1159, %v1161
        %v1163 = vrot.slane %v615, 2
        %v1164 = vrot.slane %v616, 2
        %v1165 = vsel %vm692, %v1163, %v1164
        %v1166 = vrot.slane %v617, 2
        %v1167 = vsel %vm692, %v1164, %v1166
        %v1168 = vrot.slane %v618, 2
        %v1169 = vrot.slane %v619, 2
        %v1170 = vsel %vm692, %v1168, %v1169
        %v1171 = vrot.slane %v620, 2
        %v1172 = vsel %vm692, %v1169, %v1171
        %v1173 = vrot.slane %v621, 2
        %v1174 = vrot.slane %v622, 2
        %v1175 = vsel %vm692, %v1173, %v1174
        %v1176 = vrot.slane %v623, 2
        %v1177 = vsel %vm692, %v1174, %v1176
        %v1178 = vrot.slane %v624, 2
        %v1179 = vrot.slane %v625, 2
        %v1180 = vsel %vm692, %v1178, %v1179
        %v1181 = vrot.slane %v626, 2
        %v1182 = vsel %vm692, %v1179, %v1181
        %v1183 = vrot.slane %v627, 2
        %v1184 = vrot.slane %v628, 2
        %v1185 = vsel %vm692, %v1183, %v1184
        %v1186 = vrot.slane %v629, 2
        %v1187 = vsel %vm692, %v1184, %v1186
        %v1188 = vrot.slane %v630, 2
        %v1189 = vrot.slane %v631, 2
        %v1190 = vsel %vm692, %v1188, %v1189
        %v1191 = vrot.slane %v632, 2
        %v1192 = vsel %vm692, %v1189, %v1191
        %v1193 = vrot.slane %v633, 2
        %v1194 = vrot.slane %v634, 2
        %v1195 = vsel %vm692, %v1193, %v1194
        %v1196 = vrot.slane %v635, 2
        %v1197 = vsel %vm692, %v1194, %v1196
        %1198 = vrot.lane.b32.xlu0 %v1160, 24
        %v1199 = vpop.permute.xlu0 %1198
        %1200 = vrot.lane.b32.xlu0 %v1162, 24
        %v1201 = vpop.permute.xlu0 %1200
        %1202 = vrot.lane.b32.xlu0 %v1165, 24
        %v1203 = vpop.permute.xlu0 %1202
        %1204 = vrot.lane.b32.xlu0 %v1167, 24
        %v1205 = vpop.permute.xlu0 %1204
        %1206 = vrot.lane.b32.xlu0 %v1170, 24
        %v1207 = vpop.permute.xlu0 %1206
        %1208 = vrot.lane.b32.xlu0 %v1172, 24
        %v1209 = vpop.permute.xlu0 %1208
        %1210 = vrot.lane.b32.xlu0 %v1175, 24
        %v1211 = vpop.permute.xlu0 %1210
        %1212 = vrot.lane.b32.xlu0 %v1177, 24
        %v1213 = vpop.permute.xlu0 %1212
        %1214 = vrot.lane.b32.xlu0 %v1180, 24
        %v1215 = vpop.permute.xlu0 %1214
        %1216 = vrot.lane.b32.xlu0 %v1182, 24
        %v1217 = vpop.permute.xlu0 %1216
        %1218 = vrot.lane.b32.xlu0 %v1185, 24
        %v1219 = vpop.permute.xlu0 %1218
        %1220 = vrot.lane.b32.xlu0 %v1187, 24
        %v1221 = vpop.permute.xlu0 %1220
        %1222 = vrot.lane.b32.xlu0 %v1190, 24
        %v1223 = vpop.permute.xlu0 %1222
        %1224 = vrot.lane.b32.xlu0 %v1192, 24
        %v1225 = vpop.permute.xlu0 %1224
        %1226 = vrot.lane.b32.xlu0 %v1195, 24
        %v1227 = vpop.permute.xlu0 %1226
        %1228 = vrot.lane.b32.xlu0 %v1197, 24
        %v1229 = vpop.permute.xlu0 %1228
        %v1270 = vrot.slane %v644, 4
        %v1271 = vrot.slane %v645, 4
        %v1272 = vsel %vm805, %v1270, %v1271
        %v1273 = vrot.slane %v646, 4
        %v1274 = vsel %vm805, %v1271, %v1273
        %v1275 = vrot.slane %v647, 4
        %v1276 = vrot.slane %v648, 4
        %v1277 = vsel %vm805, %v1275, %v1276
        %v1278 = vrot.slane %v649, 4
        %v1279 = vsel %vm805, %v1276, %v1278
        %v1280 = vrot.slane %v650, 4
        %v1281 = vrot.slane %v651, 4
        %v1282 = vsel %vm805, %v1280, %v1281
        %v1283 = vrot.slane %v652, 4
        %v1284 = vsel %vm805, %v1281, %v1283
        %v1285 = vrot.slane %v653, 4
        %v1286 = vrot.slane %v654, 4
        %v1287 = vsel %vm805, %v1285, %v1286
        %v1288 = vrot.slane %v655, 4
        %v1289 = vsel %vm805, %v1286, %v1288
        %v1290 = vrot.slane %v656, 4
        %v1291 = vrot.slane %v657, 4
        %v1292 = vsel %vm805, %v1290, %v1291
        %v1293 = vrot.slane %v658, 4
        %v1294 = vsel %vm805, %v1291, %v1293
        %v1295 = vrot.slane %v659, 4
        %v1296 = vrot.slane %v660, 4
        %v1297 = vsel %vm805, %v1295, %v1296
        %v1298 = vrot.slane %v661, 4
        %v1299 = vsel %vm805, %v1296, %v1298
        %v1300 = vrot.slane %v662, 4
        %v1301 = vrot.slane %v663, 4
        %v1302 = vsel %vm805, %v1300, %v1301
        %v1303 = vrot.slane %v664, 4
        %v1304 = vsel %vm805, %v1301, %v1303
        %v1305 = vrot.slane %v665, 4
        %v1306 = vrot.slane %v666, 4
        %v1307 = vsel %vm805, %v1305, %v1306
        %v1308 = vrot.slane %v667, 4
        %v1309 = vsel %vm805, %v1306, %v1308
        %1310 = vrot.lane.b32.xlu0 %v1272, 28
        %v1311 = vpop.permute.xlu0 %1310
        %1312 = vrot.lane.b32.xlu0 %v1274, 28
        %v1313 = vpop.permute.xlu0 %1312
        %1314 = vrot.lane.b32.xlu0 %v1277, 28
        %v1315 = vpop.permute.xlu0 %1314
        %1316 = vrot.lane.b32.xlu0 %v1279, 28
        %v1317 = vpop.permute.xlu0 %1316
        %1318 = vrot.lane.b32.xlu0 %v1282, 28
        %v1319 = vpop.permute.xlu0 %1318
        %1320 = vrot.lane.b32.xlu0 %v1284, 28
        %v1321 = vpop.permute.xlu0 %1320
        %1322 = vrot.lane.b32.xlu0 %v1287, 28
        %v1323 = vpop.permute.xlu0 %1322
        %1324 = vrot.lane.b32.xlu0 %v1289, 28
        %v1325 = vpop.permute.xlu0 %1324
        %1326 = vrot.lane.b32.xlu0 %v1292, 28
        %v1327 = vpop.permute.xlu0 %1326
        %1328 = vrot.lane.b32.xlu0 %v1294, 28
        %v1329 = vpop.permute.xlu0 %1328
        %1330 = vrot.lane.b32.xlu0 %v1297, 28
        %v1331 = vpop.permute.xlu0 %1330
        %1332 = vrot.lane.b32.xlu0 %v1299, 28
        %v1333 = vpop.permute.xlu0 %1332
        %1334 = vrot.lane.b32.xlu0 %v1302, 28
        %v1335 = vpop.permute.xlu0 %1334
        %1336 = vrot.lane.b32.xlu0 %v1304, 28
        %v1337 = vpop.permute.xlu0 %1336
        %1338 = vrot.lane.b32.xlu0 %v1307, 28
        %v1339 = vpop.permute.xlu0 %1338
        %1340 = vrot.lane.b32.xlu0 %v1309, 28
        %v1341 = vpop.permute.xlu0 %1340
        %vm1358 = vcmask 31744
        %v1359 = vsel %vm1358, %v399, %v734
        %v1360 = vsel %vm1358, %v400, %v736
        %v1361 = vsel %vm1358, %v401, %v738
        %v1362 = vsel %vm1358, %v402, %v740
        %v1363 = vsel %vm1358, %v403, %v742
        %v1364 = vsel %vm1358, %v404, %v744
        %v1365 = vsel %vm1358, %v405, %v746
        %v1366 = vsel %vm1358, %v406, %v748
        %v1367 = vsel %vm1358, %v407, %v750
        %v1368 = vsel %vm1358, %v408, %v752
        %v1369 = vsel %vm1358, %v409, %v754
        %v1370 = vsel %vm1358, %v410, %v756
        %v1371 = vsel %vm1358, %v411, %v758
        %v1372 = vsel %vm1358, %v412, %v760
        %v1373 = vsel %vm1358, %v413, %v762
        %v1374 = vsel %vm1358, %v414, %v764
        %vm1375 = vcmask 64512
        %v1376 = vsel %vm1375, %v1359, %v847
        %v1377 = vsel %vm1375, %v1360, %v849
        %v1378 = vsel %vm1375, %v1361, %v851
        %v1379 = vsel %vm1375, %v1362, %v853
        %v1380 = vsel %vm1375, %v1363, %v855
        %v1381 = vsel %vm1375, %v1364, %v857
        %v1382 = vsel %vm1375, %v1365, %v859
        %v1383 = vsel %vm1375, %v1366, %v861
        %v1384 = vsel %vm1375, %v1367, %v863
        %v1385 = vsel %vm1375, %v1368, %v865
        %v1386 = vsel %vm1375, %v1369, %v867
        %v1387 = vsel %vm1375, %v1370, %v869
        %v1388 = vsel %vm1375, %v1371, %v871
        %v1389 = vsel %vm1375, %v1372, %v873
        %v1390 = vsel %vm1375, %v1373, %v875
        %v1391 = vsel %vm1375, %v1374, %v877
        %vm1392 = vcmask 97280
        %v1393 = vsel %vm1392, %v1376, %v911
        %v1394 = vsel %vm1392, %v1377, %v913
        %v1395 = vsel %vm1392, %v1378, %v915
        %v1396 = vsel %vm1392, %v1379, %v917
        %v1397 = vsel %vm1392, %v1380, %v919
        %v1398 = vsel %vm1392, %v1381, %v921
        %v1399 = vsel %vm1392, %v1382, %v923
        %v1400 = vsel %vm1392, %v1383, %v925
        %v1401 = vsel %vm1392, %v1384, %v927
        %v1402 = vsel %vm1392, %v1385, %v929
        %v1403 = vsel %vm1392, %v1386, %v931
        %v1404 = vsel %vm1392, %v1387, %v933
        %v1405 = vsel %vm1392, %v1388, %v935
        %v1406 = vsel %vm1392, %v1389, %v937
        %v1407 = vsel %vm1392, %v1390, %v939
        %v1408 = vsel %vm1392, %v1391, %v941
        %vm1409 = vcmask 130048
        %v1410 = vsel %vm1409, %v1393, %v1023
        %v1411 = vsel %vm1409, %v1394, %v1025
        %v1412 = vsel %vm1409, %v1395, %v1027
        %v1413 = vsel %vm1409, %v1396, %v1029
        %v1414 = vsel %vm1409, %v1397, %v1031
        %v1415 = vsel %vm1409, %v1398, %v1033
        %v1416 = vsel %vm1409, %v1399, %v1035
        %v1417 = vsel %vm1409, %v1400, %v1037
        %v1418 = vsel %vm1409, %v1401, %v1039
        %v1419 = vsel %vm1409, %v1402, %v1041
        %v1420 = vsel %vm1409, %v1403, %v1043
        %v1421 = vsel %vm1409, %v1404, %v1045
        %v1422 = vsel %vm1409, %v1405, %v1047
        %v1423 = vsel %vm1409, %v1406, %v1049
        %v1424 = vsel %vm1409, %v1407, %v1051
        %v1425 = vsel %vm1409, %v1408, %v1053
        %vm1426 = vcmask 162816
        %v1427 = vsel %vm1426, %v1410, %v1087
        %v1428 = vsel %vm1426, %v1411, %v1089
        %v1429 = vsel %vm1426, %v1412, %v1091
        %v1430 = vsel %vm1426, %v1413, %v1093
        %v1431 = vsel %vm1426, %v1414, %v1095
        %v1432 = vsel %vm1426, %v1415, %v1097
        %v1433 = vsel %vm1426, %v1416, %v1099
        %v1434 = vsel %vm1426, %v1417, %v1101
        %v1435 = vsel %vm1426, %v1418, %v1103
        %v1436 = vsel %vm1426, %v1419, %v1105
        %v1437 = vsel %vm1426, %v1420, %v1107
        %v1438 = vsel %vm1426, %v1421, %v1109
        %v1439 = vsel %vm1426, %v1422, %v1111
        %v1440 = vsel %vm1426, %v1423, %v1113
        %v1441 = vsel %vm1426, %v1424, %v1115
        %v1442 = vsel %vm1426, %v1425, %v1117
        %vm1443 = vcmask 195584
        %v1444 = vsel %vm1443, %v1427, %v1199
        %v1445 = vsel %vm1443, %v1428, %v1201
        %v1446 = vsel %vm1443, %v1429, %v1203
        %v1447 = vsel %vm1443, %v1430, %v1205
        %v1448 = vsel %vm1443, %v1431, %v1207
        %v1449 = vsel %vm1443, %v1432, %v1209
        %v1450 = vsel %vm1443, %v1433, %v1211
        %v1451 = vsel %vm1443, %v1434, %v1213
        %v1452 = vsel %vm1443, %v1435, %v1215
        %v1453 = vsel %vm1443, %v1436, %v1217
        %v1454 = vsel %vm1443, %v1437, %v1219
        %v1455 = vsel %vm1443, %v1438, %v1221
        %v1456 = vsel %vm1443, %v1439, %v1223
        %v1457 = vsel %vm1443, %v1440, %v1225
        %v1458 = vsel %vm1443, %v1441, %v1227
        %v1459 = vsel %vm1443, %v1442, %v1229
        %vm1460 = vcmask 228352
        %v1461 = vsel %vm1460, %v1444, %v1311
        %v1462 = vsel %vm1460, %v1445, %v1313
        %v1463 = vsel %vm1460, %v1446, %v1315
        %v1464 = vsel %vm1460, %v1447, %v1317
        %v1465 = vsel %vm1460, %v1448, %v1319
        %v1466 = vsel %vm1460, %v1449, %v1321
        %v1467 = vsel %vm1460, %v1450, %v1323
        %v1468 = vsel %vm1460, %v1451, %v1325
        %v1469 = vsel %vm1460, %v1452, %v1327
        %v1470 = vsel %vm1460, %v1453, %v1329
        %v1471 = vsel %vm1460, %v1454, %v1331
        %v1472 = vsel %vm1460, %v1455, %v1333
        %v1473 = vsel %vm1460, %v1456, %v1335
        %v1474 = vsel %vm1460, %v1457, %v1337
        %v1475 = vsel %vm1460, %v1458, %v1339
        %v1476 = vsel %vm1460, %v1459, %v1341
        %v1477 = vld [vmem:[%s280] sm:$0xff]
        %v1478 = vld [vmem:[%s280 + $0x8] sm:$0xff]
        %v1479 = vld [vmem:[%s280 + $0x10] sm:$0xff]
        %v1480 = vld [vmem:[%s280 + $0x18] sm:$0xff]
        %vm1481 = vcmask 261120
        %v1483 = vsel %vm1481, %v1461, 0
        %v1486 = vsel %vm1481, %v1462, 0
        %v1489 = vsel %vm1481, %v1463, 0
        %v1492 = vsel %vm1481, %v1464, 0
        %v1495 = vsel %vm1481, %v1465, 0
        %v1498 = vsel %vm1481, %v1466, 0
        %v1501 = vsel %vm1481, %v1467, 0
        %v1504 = vsel %vm1481, %v1468, 0
        %v1507 = vsel %vm1481, %v1469, 0
        %v1510 = vsel %vm1481, %v1470, 0
        %v1513 = vsel %vm1481, %v1471, 0
        %v1516 = vsel %vm1481, %v1472, 0
        %v1519 = vsel %vm1481, %v1473, 0
        %v1522 = vsel %vm1481, %v1474, 0
        %v1525 = vsel %vm1481, %v1475, 0
        %v1528 = vsel %vm1481, %v1476, 0
        %1530 = vmatprep.subr.mxu0 0.0
        %1531 = vmatpush1.msra.mxu0 %v1477
        %1532 = vmatprep.subr.mxu0 0.0
        %1533 = vmatpush1.msra.mxu0 %v1478
        %1534 = vmatprep.subr.mxu0 0.0
        %1535 = vmatpush1.msra.mxu0 %v1479
        %1536 = vmatprep.subr.mxu0 0.0
        %1537 = vmatpush1.msra.mxu0 %v1480
        %1538 = vmatprep.subr.mxu0 0.0
        %1539 = vmatpush1.msra.mxu0 0.0
        %1540 = vmatprep.subr.mxu0 0.0
        %1541 = vmatpush1.msra.mxu0 0.0
        %1542 = vmatprep.subr.mxu0 0.0
        %1543 = vmatpush1.msra.mxu0 0.0
        %1544 = vmatprep.subr.mxu0 0.0
        %1545 = vmatpush1.msra.mxu0 0.0
        %1546 = vmatprep.subr.mxu0 0.0
        %1547 = vmatpush1.msra.mxu0 0.0
        %1548 = vmatprep.subr.mxu0 0.0
        %1549 = vmatpush1.msra.mxu0 0.0
        %1550 = vmatprep.subr.mxu0 0.0
        %1551 = vmatpush1.msra.mxu0 0.0
        %1552 = vmatprep.subr.mxu0 0.0
        %1553 = vmatpush1.msra.mxu0 0.0
        %1554 = vmatprep.subr.mxu0 0.0
        %1555 = vmatpush1.msra.mxu0 0.0
        %1556 = vmatprep.subr.mxu0 0.0
        %1557 = vmatpush1.msra.mxu0 0.0
        %1558 = vmatprep.subr.mxu0 0.0
        %1559 = vmatpush1.msra.mxu0 0.0
        %1560 = vmatprep.subr.mxu0 0.0
        %1561 = vmatpush1.msra.mxu0 0.0
        %1562 = vmatprep.subr.mxu0 0.0
        %1563 = vmatpush1.msra.mxu0 0.0
        %1564 = vmatprep.subr.mxu0 0.0
        %1565 = vmatpush1.msra.mxu0 0.0
        %1566 = vmatprep.subr.mxu0 0.0
        %1567 = vmatpush1.msra.mxu0 0.0
        %1568 = vmatprep.subr.mxu0 0.0
        %1569 = vmatpush1.msra.mxu0 0.0
        %1570 = vmatprep.subr.mxu0 0.0
        %1571 = vmatpush1.msra.mxu0 0.0
        %1572 = vmatprep.subr.mxu0 0.0
        %1573 = vmatpush1.msra.mxu0 0.0
        %1574 = vmatprep.subr.mxu0 0.0
        %1575 = vmatpush1.msra.mxu0 0.0
        %1576 = vmatprep.subr.mxu0 0.0
        %1577 = vmatpush1.msra.mxu0 0.0
        %1578 = vmatprep.subr.mxu0 0.0
        %1579 = vmatpush1.msra.mxu0 0.0
        %1580 = vmatprep.subr.mxu0 0.0
        %1581 = vmatpush1.msra.mxu0 0.0
        %1582 = vmatprep.subr.mxu0 0.0
        %1583 = vmatpush1.msra.mxu0 0.0
        %1584 = vmatprep.subr.mxu0 0.0
        %1585 = vmatpush1.msra.mxu0 0.0
        %1586 = vmatprep.subr.mxu0 0.0
        %1587 = vmatpush1.msra.mxu0 0.0
        %1588 = vmatprep.subr.mxu0 0.0
        %1589 = vmatpush1.msra.mxu0 0.0
        %1590 = vmatprep.subr.mxu0 0.0
        %1591 = vmatpush1.msra.mxu0 0.0
        %1592 = vmatprep.subr.mxu0 0.0
        %1593 = vmatpush1.msra.mxu0 0.0
        %1594 = vmatprep.mubr.f32.mxu0 0.0
        %1595 = vmatmul.mubr.f32.gmra.mrb[0].mxu0 %v1483
        %v1596 = vpop.f32.mrb[0].mxu0
        %v1597 = vadd.f32 0.0, %v1596
        %v1598 = vpop.f32.mrb[0].mxu0
        %1599 = vmatprep.mubr.f32.mxu0 0.0
        %1600 = vmatmul.mubr.f32.gmra.mrb[0].mxu0 %v1486
        %v1601 = vpop.f32.mrb[0].mxu0
        %v1602 = vadd.f32 0.0, %v1601
        %v1603 = vpop.f32.mrb[0].mxu0
        %1604 = vmatprep.mubr.f32.mxu0 0.0
        %1605 = vmatmul.mubr.f32.gmra.mrb[0].mxu0 %v1489
        %v1606 = vpop.f32.mrb[0].mxu0
        %v1607 = vadd.f32 0.0, %v1606
        %v1608 = vpop.f32.mrb[0].mxu0
        %1609 = vmatprep.mubr.f32.mxu0 0.0
        %1610 = vmatmul.mubr.f32.gmra.mrb[0].mxu0 %v1492
        %v1611 = vpop.f32.mrb[0].mxu0
        %v1612 = vadd.f32 0.0, %v1611
        %v1613 = vpop.f32.mrb[0].mxu0
        %1614 = vmatprep.mubr.f32.mxu0 0.0
        %1615 = vmatmul.mubr.f32.gmra.mrb[0].mxu0 %v1495
        %v1616 = vpop.f32.mrb[0].mxu0
        %v1617 = vadd.f32 0.0, %v1616
        %v1618 = vpop.f32.mrb[0].mxu0
        %1619 = vmatprep.mubr.f32.mxu0 0.0
        %1620 = vmatmul.mubr.f32.gmra.mrb[0].mxu0 %v1498
        %v1621 = vpop.f32.mrb[0].mxu0
        %v1622 = vadd.f32 0.0, %v1621
        %v1623 = vpop.f32.mrb[0].mxu0
        %1624 = vmatprep.mubr.f32.mxu0 0.0
        %1625 = vmatmul.mubr.f32.gmra.mrb[0].mxu0 %v1501
        %v1626 = vpop.f32.mrb[0].mxu0
        %v1627 = vadd.f32 0.0, %v1626
        %v1628 = vpop.f32.mrb[0].mxu0
        %1629 = vmatprep.mubr.f32.mxu0 0.0
        %1630 = vmatmul.mubr.f32.gmra.mrb[0].mxu0 %v1504
        %v1631 = vpop.f32.mrb[0].mxu0
        %v1632 = vadd.f32 0.0, %v1631
        %v1633 = vpop.f32.mrb[0].mxu0
        %1634 = vmatprep.mubr.f32.mxu0 0.0
        %1635 = vmatmul.mubr.f32.gmra.mrb[0].mxu0 %v1507
        %v1636 = vpop.f32.mrb[0].mxu0
        %v1637 = vadd.f32 0.0, %v1636
        %v1638 = vpop.f32.mrb[0].mxu0
        %1639 = vmatprep.mubr.f32.mxu0 0.0
        %1640 = vmatmul.mubr.f32.gmra.mrb[0].mxu0 %v1510
        %v1641 = vpop.f32.mrb[0].mxu0
        %v1642 = vadd.f32 0.0, %v1641
        %v1643 = vpop.f32.mrb[0].mxu0
        %1644 = vmatprep.mubr.f32.mxu0 0.0
        %1645 = vmatmul.mubr.f32.gmra.mrb[0].mxu0 %v1513
        %v1646 = vpop.f32.mrb[0].mxu0
        %v1647 = vadd.f32 0.0, %v1646
        %v1648 = vpop.f32.mrb[0].mxu0
        %1649 = vmatprep.mubr.f32.mxu0 0.0
        %1650 = vmatmul.mubr.f32.gmra.mrb[0].mxu0 %v1516
        %v1651 = vpop.f32.mrb[0].mxu0
        %v1652 = vadd.f32 0.0, %v1651
        %v1653 = vpop.f32.mrb[0].mxu0
        %1654 = vmatprep.mubr.f32.mxu0 0.0
        %1655 = vmatmul.mubr.f32.gmra.mrb[0].mxu0 %v1519
        %v1656 = vpop.f32.mrb[0].mxu0
        %v1657 = vadd.f32 0.0, %v1656
        %v1658 = vpop.f32.mrb[0].mxu0
        %1659 = vmatprep.mubr.f32.mxu0 0.0
        %1660 = vmatmul.mubr.f32.gmra.mrb[0].mxu0 %v1522
        %v1661 = vpop.f32.mrb[0].mxu0
        %v1662 = vadd.f32 0.0, %v1661
        %v1663 = vpop.f32.mrb[0].mxu0
        %1664 = vmatprep.mubr.f32.mxu0 0.0
        %1665 = vmatmul.mubr.f32.gmra.mrb[0].mxu0 %v1525
        %v1666 = vpop.f32.mrb[0].mxu0
        %v1667 = vadd.f32 0.0, %v1666
        %v1668 = vpop.f32.mrb[0].mxu0
        %1669 = vmatprep.mubr.f32.mxu0 0.0
        %1670 = vmatmul.mubr.f32.gmra.mrb[0].mxu0 %v1528
        %v1671 = vpop.f32.mrb[0].mxu0
        %v1672 = vadd.f32 0.0, %v1671
        %v1673 = vpop.f32.mrb[0].mxu0
        %1674 = vdwg.mxu0
        %1675 = vst [vmem:[%s250] sm:$0xff] %v1597
        %1676 = vst [vmem:[%s250 + $0x8] sm:$0xff] %v1602
        %1677 = vst [vmem:[%s250 + $0x10] sm:$0xff] %v1607
        %1678 = vst [vmem:[%s250 + $0x18] sm:$0xff] %v1612
        %1679 = vst [vmem:[%s250 + $0x20] sm:$0xff] %v1617
        %1680 = vst [vmem:[%s250 + $0x28] sm:$0xff] %v1622
        %1681 = vst [vmem:[%s250 + $0x30] sm:$0xff] %v1627
        %1682 = vst [vmem:[%s250 + $0x38] sm:$0xff] %v1632
        %1683 = vst [vmem:[%s250 + $0x40] sm:$0xff] %v1637
        %1684 = vst [vmem:[%s250 + $0x48] sm:$0xff] %v1642
        %1685 = vst [vmem:[%s250 + $0x50] sm:$0xff] %v1647
        %1686 = vst [vmem:[%s250 + $0x58] sm:$0xff] %v1652
        %1687 = vst [vmem:[%s250 + $0x60] sm:$0xff] %v1657
        %1688 = vst [vmem:[%s250 + $0x68] sm:$0xff] %v1662
        %1689 = vst [vmem:[%s250 + $0x70] sm:$0xff] %v1667
        %1690 = vst [vmem:[%s250 + $0x78] sm:$0xff] %v1672
        %s1691 = sand.u32 %s134, 1
        %s1692 = scalar_lea.sflag [#allocation3], %s1691
        %s1693 = sand.u32 %s134, 1
        %s1694 = smul.addr %s1693, 128
        %s1695 = scalar_lea.vmem [#allocation2], %s1694
        // Predicated region
        $region33: #{tpu_custom_call.1} parent=31 // pred_check
          %p1696 = pneg %p144
        $region34: #{tpu_custom_call.1} parent=31 // pred_check_branch
          %1698 = sbr.rel (%p1696) target = $region36
        $region35: #{tpu_custom_call.1} parent=31 // pred_region
          %s1699 = smul.u32 16, %s24
          %s1701 = ssub.s32 2048, 2048
          %1702 = vsyncadd %s1692, %s1701
          %s1703 = sadd.s32 %s23, %s1699
          %s1704 = smul.addr %s22, 32
          %s1705 = sadd.s32 %s1703, %s1704
          %s1706 = smul.addr %s1705, 128
          %s1707 = scalar_lea.hbm %s3, %s1706
          %s1708 = sshll.u32 %s1695, 4
          %s1709 = int_to_ptr.vmem [resolvable:$true] %s1708
          %1714 = dma.vmem_to_hbm [thread:$0]  %s1709, 2048, %s1707, %s1692, 128, 128, 8
        $region36: #{tpu_custom_call.1} parent=31 // pred_fallthru
          _
      $region32: #{tpu_custom_call.1} parent=5 // pred_fallthru
        _
      %p1715 = scmp.le.s32.totalorder 2, %s12
      // Predicated region
      $region37: #{tpu_custom_call.1} parent=5 // pred_check
        %p1716 = pneg %p1715
      $region38: #{tpu_custom_call.1} parent=5 // pred_check_branch
        %1718 = sbr.rel (%p1716) target = $region40
      $region39: #{tpu_custom_call.1} parent=5 // pred_region
        %s1719 = ssub.s32 %s12, 2
        // Predicated region
        $region41: #{tpu_custom_call.1} parent=39 // pred_check
          %p1720 = pneg %p150
        $region42: #{tpu_custom_call.1} parent=39 // pred_check_branch
          %1722 = sbr.rel (%p1720) target = $region44
        $region43: #{tpu_custom_call.1} parent=39 // pred_region
          %s1723 = sand.u32 %s135, 1
          %s1724 = scalar_lea.sflag [#allocation3], %s1723
          %s1725 = sand.u32 %s135, 1
          %s1726 = smul.addr %s1725, 128
          %s1727 = scalar_lea.vmem [#allocation2], %s1726
          %1728 = dma.done %s1724, 2048
        $region44: #{tpu_custom_call.1} parent=39 // pred_fallthru
          _
      $region40: #{tpu_custom_call.1} parent=5 // pred_fallthru
        _
    $region6: #{tpu_custom_call.1} parent=1 // loop_footer
      %s16 = sadd.s32 1, %s12
    $region7: #{tpu_custom_call.1} parent=1 // loop_footer_branch
      %11 = sbr.rel target = $region3
    $region8: #{tpu_custom_call.1} parent=1 // loop_exit
      _
    %1729 = vsyncpa [#allocation3], 1
    %s1730 = scalar_lea.sflag [#allocation3], 1
    %1731 = vsyncpa %s1730, 1

</llo_original>
